<compile_context>
chip_gen: v5e
topology: v5e:2x2
jax: 0.10.0
libtpu: 0.0.40
codegen_flags: <defaults>
</compile_context>

<pallas_src>
import jax
import jax.numpy as jnp
from jax.experimental import pallas as pl
from jax.experimental.pallas import tpu as pltpu

_LANES = 128       # vreg lane width
_MAX_CHUNKS = 4    # max in-flight HBM->HBM DMAs


def _sublanes_for(dtype) -> int:
    """Dtype-aware sublane granularity (8 f32, 16 bf16, 32 int8/fp8)."""
    itemsize = jnp.dtype(dtype).itemsize
    return max(8, (4 // itemsize) * 8)


def _make_hbm_copy_kernel(chunk_bounds):
    """Kernel: issue one HBM->HBM DMA per chunk, all in flight, then wait."""
    def kernel(x_hbm, o_hbm, sems):
        copies = []
        for idx, (start, size) in enumerate(chunk_bounds):
            cp = pltpu.make_async_copy(
                x_hbm.at[pl.ds(start, size)],
                o_hbm.at[pl.ds(start, size)],
                sems.at[idx],
            )
            cp.start()
            copies.append(cp)
        for cp in copies:
            cp.wait()
    return kernel


def _hbm_copy(x: jax.Array) -> jax.Array:
    """Identity copy as chunked HBM->HBM DMA (no VMEM round-trip)."""
    lead = x.shape[0]
    sub = _sublanes_for(x.dtype)

    # Chunk the leading axis into up to _MAX_CHUNKS sublane-granular pieces
    # so several DMAs are in flight at once; tiny arrays use a single copy.
    if lead >= 2 * sub:
        n_chunks = min(_MAX_CHUNKS, lead // sub)
        base = (lead // n_chunks) // sub * sub
        bounds = []
        start = 0
        for c in range(n_chunks):
            size = base if c < n_chunks - 1 else lead - start
            bounds.append((start, size))
            start += size
    else:
        bounds = [(0, lead)]

    return pl.pallas_call(
        _make_hbm_copy_kernel(tuple(bounds)),
        out_shape=jax.ShapeDtypeStruct(x.shape, x.dtype),
        in_specs=[pl.BlockSpec(memory_space=pl.ANY)],
        out_specs=pl.BlockSpec(memory_space=pl.ANY),
        scratch_shapes=[pltpu.SemaphoreType.DMA((len(bounds),))],
    )(x)


def split_cat(v1: jax.Array) -> jax.Array:
    """torch.split(v1, [1, 1], dim=1) + torch.cat(dim=1) == identity copy."""
    n, c, h, w = v1.shape
    assert c == 2, "split sizes [1, 1] require dim=1 size of exactly 2"

    total = n * c * h * w
    if total % _LANES == 0:
        # Lane-dense 2-D view: long contiguous DMA rows, metadata-only reshape.
        rows = total // _LANES
        out2d = _hbm_copy(v1.reshape(rows, _LANES))
        return out2d.reshape(n, c, h, w)

    # Unaligned element count: DMA the original NCHW shape directly.  DMA has
    # no (8,128) block constraint, so this stays correct for any shape and
    # never forces the whole array into VMEM.
    return _hbm_copy(v1)


class Model:
    """JAX/Pallas port of the reference PyTorch module."""

    def __init__(self):
        # The reference module creates Conv2d(3, 32, 1, 1, 0) parameters that
        # are never used in forward(); they are intentionally omitted here.
        pass

    def forward(self, v1):
        concatenated_tensor = split_cat(v1)
        return (concatenated_tensor,)


if __name__ == "__main__":
    key = jax.random.PRNGKey(0)
    # split sizes [1, 1] along dim=1 imply C == 2
    v1 = jax.random.normal(key, (2, 2, 16, 16), dtype=jnp.float32)

    model = Model()
    (out,) = model.forward(v1)
    out = jax.block_until_ready(out)

    # semantics check: split + cat along dim=1 is the identity
    assert out.shape == v1.shape and out.dtype == v1.dtype
    assert bool(jnp.allclose(out, v1))

    print("KERNEL_OK")
</pallas_src>

<mosaic_0001>
module attributes {stable_mosaic.version = 11 : i64} {
  func.func @kernel(%arg0: memref<8x128xf32, #tpu.memory_space<any>>, %arg1: memref<8x128xf32, #tpu.memory_space<any>>, %arg2: memref<1x!tpu.dma_semaphore, #tpu.memory_space<semaphore_mem>>) attributes {dimension_semantics = [], scalar_prefetch = 0 : i64, scratch_operands = 1 : i64, tpu.core_type = #tpu.core_type<tc>} {
    %c0_i32 = arith.constant 0 : i32
    %c0_i32_0 = arith.constant 0 : i32
    %c0_i32_1 = arith.constant 0 : i32
    %0 = tpu.memref_slice %arg0[%c0_i32_0, %c0_i32_1] : memref<8x128xf32, #tpu.memory_space<any>> -> memref<8x128xf32, #tpu.memory_space<any>>
    %c0_i32_2 = arith.constant 0 : i32
    %c0_i32_3 = arith.constant 0 : i32
    %1 = tpu.memref_slice %arg1[%c0_i32_2, %c0_i32_3] : memref<8x128xf32, #tpu.memory_space<any>> -> memref<8x128xf32, #tpu.memory_space<any>>
    %2 = tpu.memref_slice %arg2[%c0_i32] : memref<1x!tpu.dma_semaphore, #tpu.memory_space<semaphore_mem>> -> memref<1x!tpu.dma_semaphore, #tpu.memory_space<semaphore_mem>>
    %3 = tpu.memref_squeeze %2 : memref<1x!tpu.dma_semaphore, #tpu.memory_space<semaphore_mem>> -> memref<!tpu.dma_semaphore, #tpu.memory_space<semaphore_mem>>
    tpu.enqueue_dma source(%0 : memref<8x128xf32, #tpu.memory_space<any>>) target(%1 : memref<8x128xf32, #tpu.memory_space<any>>) target_semaphore(%3 : memref<!tpu.dma_semaphore, #tpu.memory_space<semaphore_mem>>)
    %c0_i32_4 = arith.constant 0 : i32
    %c0_i32_5 = arith.constant 0 : i32
    %c0_i32_6 = arith.constant 0 : i32
    %4 = tpu.memref_slice %arg0[%c0_i32_5, %c0_i32_6] : memref<8x128xf32, #tpu.memory_space<any>> -> memref<8x128xf32, #tpu.memory_space<any>>
    %c0_i32_7 = arith.constant 0 : i32
    %c0_i32_8 = arith.constant 0 : i32
    %5 = tpu.memref_slice %arg1[%c0_i32_7, %c0_i32_8] : memref<8x128xf32, #tpu.memory_space<any>> -> memref<8x128xf32, #tpu.memory_space<any>>
    %6 = tpu.memref_slice %arg2[%c0_i32_4] : memref<1x!tpu.dma_semaphore, #tpu.memory_space<semaphore_mem>> -> memref<1x!tpu.dma_semaphore, #tpu.memory_space<semaphore_mem>>
    %7 = tpu.memref_squeeze %6 : memref<1x!tpu.dma_semaphore, #tpu.memory_space<semaphore_mem>> -> memref<!tpu.dma_semaphore, #tpu.memory_space<semaphore_mem>>
    tpu.wait_dma2 semaphore(%7 : memref<!tpu.dma_semaphore, #tpu.memory_space<semaphore_mem>>) src(%4 : memref<8x128xf32, #tpu.memory_space<any>>) dst(%5 : memref<8x128xf32, #tpu.memory_space<any>>)
    return
  }
}

</mosaic_0001>

<llo_original>
// kernel: tpu_custom_call.1
$region0: #{tpu_custom_call.1}
  #allocation0 [shape = 'u32[]', space=smem, size = 0x4, offset = 0x4, fixed_abs, tag = 'smem constant byte address 0x4 - core index']
  #allocation1 [shape = 'u32[72,128]{1,0:T(1,128)}', space=vmem, size = 0x9000, scoped, tag = 'internal scratch']
  #allocation2 [shape = 's32[1]{0}', space=sflag, size = 0x4, scoped, tag = 'scratch operand']
  #allocation3 [shape = 's32[]', space=sflag, size = 0x4, offset = 0, fixed_abs, tag = 'sflag constant byte address 0x0 - dummy sync flag']
  #allocation4 [shape = 'u32[0]{0}', space=smem, size = 0, offset = 0, fixed_abs, tag = 'smem constant byte address 0x0 - null']
  %s0 = inlined_call_operand.hbm [shape: f32[8,128], index: 0, kind: input, shape index: {}]
  %s1 = inlined_call_operand.hbm [shape: f32[8,128], index: 1, kind: output, shape index: {}]
  %s2 = sld [smem:[#allocation0]]
  $region2: #{tpu_custom_call.1} parent=0
    _
  %s4 = ssub.s32 1, %s2
  %s5 = scalar_select 0, %s4, %s2
  %s7 = sshll.u32 1, 14
  %s8 = sxor.u32 4294967295, %s7
  %s10 = sshll.u32 %s0, 4
  %s11 = int_to_ptr.hbm [resolvable:$true] %s10
  %s12 = sshll.u32 %s1, 4
  %s13 = int_to_ptr.hbm [resolvable:$true] %s12
  %16 = dma.general %s11, 128, %s13, [#allocation2], [#allocation3], [#allocation4], 0, 0
  %s17 = smul.u32 8, 1
  %s18 = sshll.u32 %s17, 4
  %19 = dma.done [#allocation2], %s18
  %20 = vsyncmov [#allocation2]
  %s21 = vpop.sfrf %20
  %p22 = scmp.eq.s32.totalorder %s21, 0
  %p23 = pneg %p22
  %25 = shalt.err (%p23)

</llo_original>
